<compile_context>
chip_gen: v7x
topology: tpu7x:2x2x1
jax: 0.10.0
libtpu: 0.0.40
codegen_flags: <defaults>
</compile_context>

<pallas_src>
import functools

import jax
import jax.numpy as jnp
from jax import lax
from jax.experimental import pallas as pl
from jax.experimental.pallas import tpu as pltpu


def _conv1x1_kernel_per_batch(w_ref, x_ref, o_ref):
    # One grid step per batch image (v7x path).
    # w_ref: (Cout, Cin)   x_ref: (Cin, HW)   o_ref: (Cout, HW)
    o_ref[...] = jnp.dot(w_ref[...], x_ref[...],
                         preferred_element_type=jnp.float32)


def _conv1x1_kernel_whole_batch(w_ref, x_ref, o_ref):
    # Single invocation processes every batch image (v5e/v6e path).
    # w_ref: (Cout, Cin)   x_ref: (B, Cin, HW)   o_ref: (B, Cout, HW)
    w = w_ref[...]
    for b in range(o_ref.shape[0]):  # B is static and tiny -> unrolled dots
        o_ref[b] = jnp.dot(w, x_ref[b], preferred_element_type=jnp.float32)


def _tensorcores_per_chip() -> int:
    """2 on dual-TC v7x, 1 otherwise (safe default: collapsed single-step grid)."""
    try:
        kind = jax.devices()[0].device_kind.lower()
    except Exception:
        return 1
    return 2 if "v7" in kind else 1


def _conv1x1_rows(weight_oi, x_rows, *, use_batch_grid):
    B, Cin, HW = x_rows.shape
    Cout = weight_oi.shape[0]
    itemsize = 4
    cost = pl.CostEstimate(
        flops=2 * B * Cout * Cin * HW,
        transcendentals=0,
        bytes_accessed=(B * Cin * HW + Cout * Cin + B * Cout * HW) * itemsize,
    )

    if use_batch_grid and B > 1:
        # Dual-TensorCore path: one image per grid step, shared across cores.
        return pl.pallas_call(
            _conv1x1_kernel_per_batch,
            out_shape=jax.ShapeDtypeStruct((B, Cout, HW), jnp.float32),
            grid_spec=pltpu.PrefetchScalarGridSpec(
                num_scalar_prefetch=0,
                grid=(B,),
                in_specs=[
                    # weight: tiny constant block, same for every grid step
                    pl.BlockSpec((Cout, Cin), lambda b: (0, 0)),
                    # x: one full image per step; batch dim squeezed out
                    pl.BlockSpec((None, Cin, HW), lambda b: (b, 0, 0)),
                ],
                out_specs=pl.BlockSpec((None, Cout, HW), lambda b: (b, 0, 0)),
            ),
            compiler_params=pltpu.CompilerParams(
                dimension_semantics=("parallel",)),
            cost_estimate=cost,
        )(weight_oi, x_rows)

    # Single-TensorCore path: whole problem (~80 KiB) resident in VMEM, one step.
    return pl.pallas_call(
        _conv1x1_kernel_whole_batch,
        out_shape=jax.ShapeDtypeStruct((B, Cout, HW), jnp.float32),
        cost_estimate=cost,
    )(weight_oi, x_rows)


@functools.partial(jax.jit, static_argnames=("use_batch_grid",))
def conv1x1_pad1_plus(x_nchw, weight_oi, bias_plus_other, *, use_batch_grid=False):
    """Equivalent of Conv2d(Cin, Cout, 1, stride=1, padding=1)(x) + other.

    x_nchw:          (B, Cin, H, W) float32
    weight_oi:       (Cout, Cin)    float32   (squeezed 1x1 conv weight)
    bias_plus_other: (Cout,)        float32   (conv bias + `other`, precomputed)
    returns          (B, Cout, H+2, W+2) float32
    """
    B, Cin, H, W = x_nchw.shape
    Cout = weight_oi.shape[0]
    HW = H * W

    # Pure reshape (no transpose): channels on sublanes, pixels on lanes.
    x_rows = x_nchw.reshape(B, Cin, HW)
    out_rows = _conv1x1_rows(weight_oi, x_rows, use_batch_grid=use_batch_grid)

    # Border of a 1x1 conv over zero padding is 0 before bias, so
    #   output = pad(W @ X, 1) + (bias + other) everywhere.
    # Under jit, reshape + pad + broadcast-add fuse into one elementwise pass.
    interior = out_rows.reshape(B, Cout, H, W)
    padded = lax.pad(interior, jnp.float32(0),
                     ((0, 0, 0), (0, 0, 0), (1, 1, 0), (1, 1, 0)))
    return padded + bias_plus_other.reshape(1, Cout, 1, 1)


if __name__ == "__main__":
    key = jax.random.PRNGKey(0)
    kx, kw, kb = jax.random.split(key, 3)

    # small shapes consistent with the module: batch=2, Cin=32, spatial=16, Cout=8
    B, Cin, H, W, Cout = 2, 32, 16, 16, 8
    x = jax.random.normal(kx, (B, Cin, H, W), dtype=jnp.float32)

    # deterministic parameter init (Conv2d(32, 8, 1) -> weight (8,32,1,1), bias (8,))
    fan_in = Cin * 1 * 1
    bound = 1.0 / (fan_in ** 0.5)
    weight = jax.random.uniform(kw, (Cout, Cin), jnp.float32, -bound, bound)
    bias = jax.random.uniform(kb, (Cout,), jnp.float32, -bound, bound)

    other = jnp.float32(1.0)                 # runtime value, never baked into kernel
    bias_plus_other = bias + other           # precomputed once, outside the hot path

    use_batch_grid = _tensorcores_per_chip() >= 2
    out = conv1x1_pad1_plus(x, weight, bias_plus_other,
                            use_batch_grid=use_batch_grid)
    out = jax.block_until_ready(out)

    # reference check (plain JAX conv with padding=1) — same semantics as the module
    ref = lax.conv_general_dilated(
        x, weight.reshape(Cout, Cin, 1, 1),
        window_strides=(1, 1), padding=((1, 1), (1, 1)),
        dimension_numbers=("NCHW", "OIHW", "NCHW"),
    ) + bias.reshape(1, Cout, 1, 1) + 1.0
    assert out.shape == (B, Cout, H + 2, W + 2)
    assert jnp.allclose(out, ref, atol=1e-4, rtol=1e-4)

    print("KERNEL_OK")
</pallas_src>

<mosaic_0001>
module attributes {stable_mosaic.version = 11 : i64} {
  func.func @_conv1x1_kernel_whole_batch(%arg0: memref<8x32xf32, #tpu.memory_space<vmem>>, %arg1: memref<2x32x256xf32, #tpu.memory_space<vmem>>, %arg2: memref<2x8x256xf32, #tpu.memory_space<vmem>>) attributes {dimension_semantics = [], scalar_prefetch = 0 : i64, scratch_operands = 0 : i64, tpu.core_type = #tpu.core_type<tc>} {
    %c0 = arith.constant 0 : index
    %c0_0 = arith.constant 0 : index
    %0 = vector.load %arg0[%c0, %c0_0] : memref<8x32xf32, #tpu.memory_space<vmem>>, vector<8x32xf32>
    %c0_1 = arith.constant 0 : index
    %c0_2 = arith.constant 0 : index
    %c0_3 = arith.constant 0 : index
    %1 = vector.load %arg1[%c0_1, %c0_2, %c0_3] : memref<2x32x256xf32, #tpu.memory_space<vmem>>, vector<1x32x256xf32>
    %2 = vector.shape_cast %1 : vector<1x32x256xf32> to vector<32x256xf32>
    %cst = arith.constant dense<0.000000e+00> : vector<8x256xf32>
    %3 = tpu.matmul %0, %2, %cst {dimension_numbers = #tpu.dot_dimension_numbers<[1], [0], [0], [1], [0, 0, 1, 1], [], []>} : vector<8x32xf32>, vector<32x256xf32>, vector<8x256xf32> -> vector<8x256xf32>
    %c0_4 = arith.constant 0 : index
    %c0_5 = arith.constant 0 : index
    %c0_6 = arith.constant 0 : index
    %4 = vector.load %arg2[%c0_4, %c0_5, %c0_6] : memref<2x8x256xf32, #tpu.memory_space<vmem>>, vector<1x8x256xf32>
    %5 = vector.shape_cast %4 : vector<1x8x256xf32> to vector<8x256xf32>
    %6 = vector.shape_cast %3 : vector<8x256xf32> to vector<1x8x256xf32>
    tpu.vector_store %arg2[%c0_4, %c0_5, %c0_6], %6 {strides = array<i32>} : memref<2x8x256xf32, #tpu.memory_space<vmem>>, vector<1x8x256xf32>,
    %c1 = arith.constant 1 : index
    %c0_7 = arith.constant 0 : index
    %c0_8 = arith.constant 0 : index
    %7 = vector.load %arg1[%c1, %c0_7, %c0_8] : memref<2x32x256xf32, #tpu.memory_space<vmem>>, vector<1x32x256xf32>
    %8 = vector.shape_cast %7 : vector<1x32x256xf32> to vector<32x256xf32>
    %cst_9 = arith.constant dense<0.000000e+00> : vector<8x256xf32>
    %9 = tpu.matmul %0, %8, %cst_9 {dimension_numbers = #tpu.dot_dimension_numbers<[1], [0], [0], [1], [0, 0, 1, 1], [], []>} : vector<8x32xf32>, vector<32x256xf32>, vector<8x256xf32> -> vector<8x256xf32>
    %c1_10 = arith.constant 1 : index
    %c0_11 = arith.constant 0 : index
    %c0_12 = arith.constant 0 : index
    %10 = vector.load %arg2[%c1_10, %c0_11, %c0_12] : memref<2x8x256xf32, #tpu.memory_space<vmem>>, vector<1x8x256xf32>
    %11 = vector.shape_cast %10 : vector<1x8x256xf32> to vector<8x256xf32>
    %12 = vector.shape_cast %9 : vector<8x256xf32> to vector<1x8x256xf32>
    tpu.vector_store %arg2[%c1_10, %c0_11, %c0_12], %12 {strides = array<i32>} : memref<2x8x256xf32, #tpu.memory_space<vmem>>, vector<1x8x256xf32>,
    return
  }
}

</mosaic_0001>

<llo_original>
// kernel: conv1x1_pad1_plus.1
$region0: #{conv1x1_pad1_plus.1}
  #allocation0 [shape = 'u32[]', space=smem, size = 0x4, offset = 0x4, fixed_abs, tag = 'smem constant byte address 0x4 - core index']
  #allocation1 [shape = 'u32[144,128]{1,0:T(1,128)}', space=vmem, size = 0x12000, scoped, tag = 'internal scratch']
  %s0 = inlined_call_operand.vmem [shape: f32[8,32], index: 0, kind: input, shape index: {}]
  %s1 = inlined_call_operand.vmem [shape: f32[2,32,256], index: 1, kind: input, shape index: {}]
  %s2 = inlined_call_operand.vmem [shape: f32[2,8,256], index: 2, kind: output, shape index: {}]
  %s3 = sld [smem:[#allocation0]]
  $region18: #{conv1x1_pad1_plus.1} parent=0
    _
  %s5 = ssub.s32 1, %s3
  %s6 = scalar_select 0, %s5, %s3
  // Predicated region
  $region2: #{conv1x1_pad1_plus.1} parent=0 // pred_check
    _
  $region3: #{conv1x1_pad1_plus.1} parent=0 // pred_check_branch
    %8 = sbr.rel (0) target = $region5
  $region4: #{conv1x1_pad1_plus.1} parent=0 // pred_region
    _
  $region5: #{conv1x1_pad1_plus.1} parent=0 // pred_fallthru
    _
  // Predicated region
  $region6: #{conv1x1_pad1_plus.1} parent=0 // pred_check
    _
  $region7: #{conv1x1_pad1_plus.1} parent=0 // pred_check_branch
    %10 = sbr.rel (0) target = $region9
  $region8: #{conv1x1_pad1_plus.1} parent=0 // pred_region
    _
  $region9: #{conv1x1_pad1_plus.1} parent=0 // pred_fallthru
    _
  %v11 = vld [vmem:[%s0] sm:$0xff]
  %v12 = vld [vmem:[%s1] sm:$0xff]
  %v13 = vld [vmem:[%s1 + $0x8] sm:$0xff]
  %v14 = vld [vmem:[%s1 + $0x10] sm:$0xff]
  %v15 = vld [vmem:[%s1 + $0x18] sm:$0xff]
  %v16 = vld [vmem:[%s1 + $0x20] sm:$0xff]
  %v17 = vld [vmem:[%s1 + $0x28] sm:$0xff]
  %v18 = vld [vmem:[%s1 + $0x30] sm:$0xff]
  %v19 = vld [vmem:[%s1 + $0x38] sm:$0xff]
  %vm20 = vcmask 261120
  %v22 = vsel %vm20, %v11, 0
  %24 = vmatprep.subr.mxu0 %v13
  %25 = vmatpush1.msra.mxu0 %v12
  %26 = vmatprep.subr.mxu0 %v15
  %27 = vmatpush1.msra.mxu0 %v14
  %28 = vmatprep.subr.mxu0 %v17
  %29 = vmatpush1.msra.mxu0 %v16
  %30 = vmatprep.subr.mxu0 %v19
  %31 = vmatpush1.msra.mxu0 %v18
  %32 = vmatprep.subr.mxu0 0.0
  %33 = vmatpush1.msra.mxu0 0.0
  %34 = vmatprep.subr.mxu0 0.0
  %35 = vmatpush1.msra.mxu0 0.0
  %36 = vmatprep.subr.mxu0 0.0
  %37 = vmatpush1.msra.mxu0 0.0
  %38 = vmatprep.subr.mxu0 0.0
  %39 = vmatpush1.msra.mxu0 0.0
  %40 = vmatprep.subr.mxu0 0.0
  %41 = vmatpush1.msra.mxu0 0.0
  %42 = vmatprep.subr.mxu0 0.0
  %43 = vmatpush1.msra.mxu0 0.0
  %44 = vmatprep.subr.mxu0 0.0
  %45 = vmatpush1.msra.mxu0 0.0
  %46 = vmatprep.subr.mxu0 0.0
  %47 = vmatpush1.msra.mxu0 0.0
  %48 = vmatprep.subr.mxu0 0.0
  %49 = vmatpush1.msra.mxu0 0.0
  %50 = vmatprep.subr.mxu0 0.0
  %51 = vmatpush1.msra.mxu0 0.0
  %52 = vmatprep.subr.mxu0 0.0
  %53 = vmatpush1.msra.mxu0 0.0
  %54 = vmatprep.subr.mxu0 0.0
  %55 = vmatpush1.msra.mxu0 0.0
  %56 = vmatprep.subr.mxu0 0.0
  %57 = vmatpush1.msra.mxu0 0.0
  %58 = vmatprep.subr.mxu0 0.0
  %59 = vmatpush1.msra.mxu0 0.0
  %60 = vmatprep.subr.mxu0 0.0
  %61 = vmatpush1.msra.mxu0 0.0
  %62 = vmatprep.subr.mxu0 0.0
  %63 = vmatpush1.msra.mxu0 0.0
  %64 = vmatprep.subr.mxu0 0.0
  %65 = vmatpush1.msra.mxu0 0.0
  %66 = vmatprep.subr.mxu0 0.0
  %67 = vmatpush1.msra.mxu0 0.0
  %68 = vmatprep.subr.mxu0 0.0
  %69 = vmatpush1.msra.mxu0 0.0
  %70 = vmatprep.subr.mxu0 0.0
  %71 = vmatpush1.msra.mxu0 0.0
  %72 = vmatprep.subr.mxu0 0.0
  %73 = vmatpush1.msra.mxu0 0.0
  %74 = vmatprep.subr.mxu0 0.0
  %75 = vmatpush1.msra.mxu0 0.0
  %76 = vmatprep.subr.mxu0 0.0
  %77 = vmatpush1.msra.mxu0 0.0
  %78 = vmatprep.subr.mxu0 0.0
  %79 = vmatpush1.msra.mxu0 0.0
  %80 = vmatprep.subr.mxu0 0.0
  %81 = vmatpush1.msra.mxu0 0.0
  %82 = vmatprep.subr.mxu0 0.0
  %83 = vmatpush1.msra.mxu0 0.0
  %84 = vmatprep.subr.mxu0 0.0
  %85 = vmatpush1.msra.mxu0 0.0
  %86 = vmatprep.subr.mxu0 0.0
  %87 = vmatpush1.msra.mxu0 0.0
  %88 = vmatprep.mubr.f32.mxu0 0.0
  %89 = vmatmul.mubr.f32.gmra.mrb[0].mxu0 %v22
  %v90 = vpop.f32.mrb[0].mxu0
  %v91 = vadd.f32 0.0, %v90
  %v92 = vpop.f32.mrb[0].mxu0
  %v93 = vadd.f32 0.0, %v92
  %94 = vdwg.mxu0
  %95 = vst [vmem:[%s2] sm:$0xff] %v91
  %96 = vst [vmem:[%s2 + $0x8] sm:$0xff] %v93
  %s97 = scalar_lea.vmem %s1, 64
  %v98 = vld [vmem:[%s97] sm:$0xff]
  %v99 = vld [vmem:[%s97 + $0x8] sm:$0xff]
  %v100 = vld [vmem:[%s97 + $0x10] sm:$0xff]
  %v101 = vld [vmem:[%s97 + $0x18] sm:$0xff]
  %v102 = vld [vmem:[%s97 + $0x20] sm:$0xff]
  %v103 = vld [vmem:[%s97 + $0x28] sm:$0xff]
  %v104 = vld [vmem:[%s97 + $0x30] sm:$0xff]
  %v105 = vld [vmem:[%s97 + $0x38] sm:$0xff]
  %106 = vmatprep.subr.mxu0 %v99
  %107 = vmatpush1.msra.mxu0 %v98
  %108 = vmatprep.subr.mxu0 %v101
  %109 = vmatpush1.msra.mxu0 %v100
  %110 = vmatprep.subr.mxu0 %v103
  %111 = vmatpush1.msra.mxu0 %v102
  %112 = vmatprep.subr.mxu0 %v105
  %113 = vmatpush1.msra.mxu0 %v104
  %114 = vmatprep.subr.mxu0 0.0
  %115 = vmatpush1.msra.mxu0 0.0
  %116 = vmatprep.subr.mxu0 0.0
  %117 = vmatpush1.msra.mxu0 0.0
  %118 = vmatprep.subr.mxu0 0.0
  %119 = vmatpush1.msra.mxu0 0.0
  %120 = vmatprep.subr.mxu0 0.0
  %121 = vmatpush1.msra.mxu0 0.0
  %122 = vmatprep.subr.mxu0 0.0
  %123 = vmatpush1.msra.mxu0 0.0
  %124 = vmatprep.subr.mxu0 0.0
  %125 = vmatpush1.msra.mxu0 0.0
  %126 = vmatprep.subr.mxu0 0.0
  %127 = vmatpush1.msra.mxu0 0.0
  %128 = vmatprep.subr.mxu0 0.0
  %129 = vmatpush1.msra.mxu0 0.0
  %130 = vmatprep.subr.mxu0 0.0
  %131 = vmatpush1.msra.mxu0 0.0
  %132 = vmatprep.subr.mxu0 0.0
  %133 = vmatpush1.msra.mxu0 0.0
  %134 = vmatprep.subr.mxu0 0.0
  %135 = vmatpush1.msra.mxu0 0.0
  %136 = vmatprep.subr.mxu0 0.0
  %137 = vmatpush1.msra.mxu0 0.0
  %138 = vmatprep.subr.mxu0 0.0
  %139 = vmatpush1.msra.mxu0 0.0
  %140 = vmatprep.subr.mxu0 0.0
  %141 = vmatpush1.msra.mxu0 0.0
  %142 = vmatprep.subr.mxu0 0.0
  %143 = vmatpush1.msra.mxu0 0.0
  %144 = vmatprep.subr.mxu0 0.0
  %145 = vmatpush1.msra.mxu0 0.0
  %146 = vmatprep.subr.mxu0 0.0
  %147 = vmatpush1.msra.mxu0 0.0
  %148 = vmatprep.subr.mxu0 0.0
  %149 = vmatpush1.msra.mxu0 0.0
  %150 = vmatprep.subr.mxu0 0.0
  %151 = vmatpush1.msra.mxu0 0.0
  %152 = vmatprep.subr.mxu0 0.0
  %153 = vmatpush1.msra.mxu0 0.0
  %154 = vmatprep.subr.mxu0 0.0
  %155 = vmatpush1.msra.mxu0 0.0
  %156 = vmatprep.subr.mxu0 0.0
  %157 = vmatpush1.msra.mxu0 0.0
  %158 = vmatprep.subr.mxu0 0.0
  %159 = vmatpush1.msra.mxu0 0.0
  %160 = vmatprep.subr.mxu0 0.0
  %161 = vmatpush1.msra.mxu0 0.0
  %162 = vmatprep.subr.mxu0 0.0
  %163 = vmatpush1.msra.mxu0 0.0
  %164 = vmatprep.subr.mxu0 0.0
  %165 = vmatpush1.msra.mxu0 0.0
  %166 = vmatprep.subr.mxu0 0.0
  %167 = vmatpush1.msra.mxu0 0.0
  %168 = vmatprep.subr.mxu0 0.0
  %169 = vmatpush1.msra.mxu0 0.0
  %170 = vmatprep.mubr.f32.mxu0 0.0
  %171 = vmatmul.mubr.f32.gmra.mrb[0].mxu0 %v22
  %v172 = vpop.f32.mrb[0].mxu0
  %v173 = vadd.f32 0.0, %v172
  %v174 = vpop.f32.mrb[0].mxu0
  %v175 = vadd.f32 0.0, %v174
  %176 = vdwg.mxu0
  %s177 = scalar_lea.vmem %s2, 16
  %178 = vst [vmem:[%s177] sm:$0xff] %v173
  %179 = vst [vmem:[%s177 + $0x8] sm:$0xff] %v175
  // Predicated region
  $region10: #{conv1x1_pad1_plus.1} parent=0 // pred_check
    _
  $region11: #{conv1x1_pad1_plus.1} parent=0 // pred_check_branch
    %181 = sbr.rel (0) target = $region13
  $region12: #{conv1x1_pad1_plus.1} parent=0 // pred_region
    _
  $region13: #{conv1x1_pad1_plus.1} parent=0 // pred_fallthru
    _
  // Predicated region
  $region14: #{conv1x1_pad1_plus.1} parent=0 // pred_check
    _
  $region15: #{conv1x1_pad1_plus.1} parent=0 // pred_check_branch
    %183 = sbr.rel (0) target = $region17
  $region16: #{conv1x1_pad1_plus.1} parent=0 // pred_region
    _
  $region17: #{conv1x1_pad1_plus.1} parent=0 // pred_fallthru
    _

</llo_original>
